<compile_context>
chip_gen: v6e
topology: v6e:2x2x1
jax: 0.10.0
libtpu: 0.0.40
codegen_flags: <defaults>
</compile_context>

<pallas_src>
import functools

import jax
import jax.numpy as jnp
from jax import lax
from jax.experimental import pallas as pl
from jax.experimental.pallas import tpu as pltpu

LANE = 128
SUBLANE_F32 = 8
TM_TARGET = 4096          # rows per grid step (multiple of CHUNK)
CHUNK = 256               # rows per in-kernel strip (bounds live ranges)


def _sublane_tile(dtype):
    # Packed-dtype sublane tile: f32 -> 8, bf16/f16 -> 16, int8/fp8 -> 32.
    return {1: 32, 2: 16}.get(jnp.dtype(dtype).itemsize, 8)


def _focal_loss_kernel(pred_ref, true_ref, out_ref, *, gamma, alpha,
                       rows_valid, chunk, n_chunks, need_mask):
    """One grid step: reduce a (n_chunks*chunk, 128) block to a (1,128) partial."""
    step = pl.program_id(0)
    block_rows = chunk * n_chunks

    def body(c, acc):
        r0 = pl.multiple_of(c * chunk, chunk)
        x = pred_ref[pl.ds(r0, chunk), :].astype(jnp.float32)
        y = true_ref[pl.ds(r0, chunk), :].astype(jnp.float32)

        # Numerically stable BCE-with-logits (matches torch.nn.BCEWithLogitsLoss):
        #   max(x,0) - x*y + log1p(exp(-|x|)); exp(-|x|) reused for sigmoid below.
        e = jnp.exp(-jnp.abs(x))
        bce = jnp.maximum(x, 0.0) - x * y + jnp.log1p(e)
        inv = pl.reciprocal(1.0 + e, approx=True)          # EUP vrcp (cheap slot)
        p = jnp.where(x >= 0.0, inv, e * inv)               # sigmoid(x)

        # Algebraically fused focal terms:
        #   t  = 1 - p_t        = p + y*(1 - 2p)
        #   af = alpha factor   = (1-alpha) + y*(2*alpha - 1)
        t = p + y * (1.0 - 2.0 * p)
        af = (1.0 - alpha) + y * (2.0 * alpha - 1.0)

        if gamma == 1.5:                                    # static Python branch
            mod = t * jnp.sqrt(t)
        elif gamma == 2.0:
            mod = t * t
        elif gamma == 1.0:
            mod = t
        elif gamma == 0.0:
            mod = jnp.ones_like(t)
        else:
            # TODO(synk): generic pow(t, gamma) has NaN grads at t==0 under autodiff;
            # forward value is fine, so keep it only for non-standard gammas.
            mod = jnp.power(t, gamma)

        loss = bce * af * mod

        if need_mask:
            # Ragged last block: rows beyond the real array extent hold garbage
            # (partial-block DMA); zero them with a pure-VPU iota compare+select.
            rows = (step * block_rows + r0
                    + lax.broadcasted_iota(jnp.int32, (chunk, LANE), 0))
            loss = jnp.where(rows < rows_valid, loss, 0.0)

        # VPU-only partial reduction onto an (8,128) accumulator (one vreg row
        # per 8-row group), no cross-lane work inside the loop.
        return acc + jnp.sum(
            loss.reshape(chunk // SUBLANE_F32, SUBLANE_F32, LANE), axis=0)

    acc0 = jnp.zeros((SUBLANE_F32, LANE), jnp.float32)
    acc = lax.fori_loop(0, n_chunks, body, acc0, unroll=False)
    # Single sublane (XLU-slot) reduce per grid step -> lane-dense (1,128) partial.
    out_ref[...] = jnp.sum(acc, axis=0, keepdims=True)


def _focal_elem(x, y, gamma, alpha):
    """Plain-JAX elementwise focal loss (ragged tail + reference)."""
    x = x.astype(jnp.float32)
    y = y.astype(jnp.float32)
    bce = jnp.maximum(x, 0.0) - x * y + jnp.log1p(jnp.exp(-jnp.abs(x)))
    p = jax.nn.sigmoid(x)
    p_t = y * p + (1.0 - y) * (1.0 - p)
    return bce * (y * alpha + (1.0 - y) * (1.0 - alpha)) * (1.0 - p_t) ** gamma


def focal_loss(pred, true, gamma=1.5, alpha=0.25, reduction="mean"):
    """Focal loss over BCE-with-logits. reduction in {'mean', 'sum'}."""
    assert pred.shape == true.shape
    orig_n = pred.size                      # static at trace time

    flat_p = pred.reshape(-1)               # keep original dtype; cast in kernel
    flat_t = true.reshape(-1)

    rows128 = orig_n // LANE
    n128 = rows128 * LANE
    sub = max(_sublane_tile(pred.dtype), _sublane_tile(true.dtype))

    if rows128 >= CHUNK:
        tm = min(TM_TARGET, (rows128 // CHUNK) * CHUNK)   # multiple of CHUNK (& of sub)
        chunk = CHUNK
    else:
        tm = (rows128 // sub) * sub                        # small-array fallback
        chunk = tm

    total = jnp.float32(0.0)
    handled = 0
    if tm > 0:
        grid_n = (rows128 + tm - 1) // tm    # ragged last block masked in-kernel
        need_mask = (grid_n * tm != rows128)
        n_chunks = tm // chunk

        # Free bitcast-reshape when orig_n is 128-aligned; otherwise a prefix
        # slice (one unavoidable HBM copy) plus the tiny plain-JAX tail below.
        src_p = flat_p if n128 == orig_n else flat_p[:n128]
        src_t = flat_t if n128 == orig_n else flat_t[:n128]
        p2 = src_p.reshape(rows128, LANE)
        t2 = src_t.reshape(rows128, LANE)

        kernel = functools.partial(
            _focal_loss_kernel, gamma=float(gamma), alpha=float(alpha),
            rows_valid=rows128, chunk=chunk, n_chunks=n_chunks,
            need_mask=need_mask)
        in_spec = pl.BlockSpec((tm, LANE), lambda i: (i, 0))

        partials = pl.pallas_call(
            kernel,
            out_shape=jax.ShapeDtypeStruct((grid_n, LANE), jnp.float32),
            grid_spec=pltpu.PrefetchScalarGridSpec(
                num_scalar_prefetch=0,
                grid=(grid_n,),
                in_specs=[in_spec, in_spec],
                out_specs=pl.BlockSpec((1, LANE), lambda i: (i, 0)),
            ),
            compiler_params=pltpu.CompilerParams(
                dimension_semantics=("parallel",)),
        )(p2, t2)
        total = jnp.sum(partials)            # tiny (grid_n,128) reduce
        handled = n128

    # <128-element remainder (and anything when the array is tiny): plain JAX,
    # fuses with its own slice so no extra materialized copy.
    if handled < orig_n:
        total = total + jnp.sum(
            _focal_elem(flat_p[handled:], flat_t[handled:], gamma, alpha))

    if reduction == "mean":
        return total / jnp.float32(orig_n)
    elif reduction == "sum":
        return total
    else:
        # TODO(synk): reduction='none' (per-element output) not wired up; the
        # module's canonical default (BCEWithLogitsLoss(reduction='mean')) is
        # what is reproduced here.
        raise NotImplementedError("reduction='none' not supported")


def _focal_loss_ref(pred, true, gamma=1.5, alpha=0.25):
    return _focal_elem(pred, true, gamma, alpha).mean()


if __name__ == "__main__":
    key = jax.random.PRNGKey(0)
    k1, k2 = jax.random.split(key)
    # NCHW inputs, small shapes: batch=2, channels=4, spatial=16x16
    pred = jax.random.normal(k1, (2, 4, 16, 16), dtype=jnp.float32) * 2.0
    true = (jax.random.uniform(k2, (2, 4, 16, 16)) > 0.7).astype(jnp.float32)

    out = focal_loss(pred, true, gamma=1.5, alpha=0.25, reduction="mean")
    out = jax.block_until_ready(out)

    ref = _focal_loss_ref(pred, true, gamma=1.5, alpha=0.25)
    # approx reciprocal (EUP vrcp) inside the kernel -> allow a small rel tolerance.
    assert jnp.allclose(out, ref, rtol=5e-3, atol=1e-6), (out, ref)
    print("KERNEL_OK")
</pallas_src>

<mosaic_0001>
module attributes {stable_mosaic.version = 11 : i64} {
  func.func @_focal_loss_kernel(%arg0: i32, %arg1: memref<16x128xf32, #tpu.memory_space<vmem>>, %arg2: memref<16x128xf32, #tpu.memory_space<vmem>>, %arg3: memref<1x128xf32, #tpu.memory_space<vmem>>) attributes {dimension_semantics = [#tpu.dimension_semantics<parallel>], iteration_bounds = array<i64: 1>, scalar_prefetch = 0 : i64, scratch_operands = 0 : i64, tpu.core_type = #tpu.core_type<tc>, window_params = [{transform_indices = @transform_0, window_bounds = array<i64: 16, 128>}, {transform_indices = @transform_1, window_bounds = array<i64: 16, 128>}, {transform_indices = @transform_2, window_bounds = array<i64: 1, 128>}]} {
    %cst = arith.constant 0.000000e+00 : f32
    %0 = vector.broadcast %cst : f32 to vector<8x128xf32>
    %c0_i32 = arith.constant 0 : i32
    %c16_i32 = arith.constant 16 : i32
    %1 = arith.muli %c0_i32, %c16_i32 : i32
    %2 = tpu.assume_multiple %1, 16 : i32
    %3 = arith.index_cast %2 : i32 to index
    %c0 = arith.constant 0 : index
    %4 = vector.load %arg1[%3, %c0] : memref<16x128xf32, #tpu.memory_space<vmem>>, vector<16x128xf32>
    %5 = arith.index_cast %2 : i32 to index
    %c0_0 = arith.constant 0 : index
    %6 = vector.load %arg2[%5, %c0_0] : memref<16x128xf32, #tpu.memory_space<vmem>>, vector<16x128xf32>
    %7 = math.absf %4 : vector<16x128xf32>
    %cst_1 = arith.constant 0.000000e+00 : f32
    %8 = vector.broadcast %cst_1 : f32 to vector<16x128xf32>
    %9 = arith.subf %8, %7 : vector<16x128xf32>
    %10 = math.exp %9 : vector<16x128xf32>
    %cst_2 = arith.constant 0.000000e+00 : f32
    %11 = vector.broadcast %cst_2 : f32 to vector<16x128xf32>
    %12 = arith.maximumf %4, %11 : vector<16x128xf32>
    %13 = arith.mulf %4, %6 : vector<16x128xf32>
    %14 = arith.subf %12, %13 : vector<16x128xf32>
    %15 = math.log1p %10 : vector<16x128xf32>
    %16 = arith.addf %14, %15 : vector<16x128xf32>
    %cst_3 = arith.constant 1.000000e+00 : f32
    %17 = vector.broadcast %cst_3 : f32 to vector<16x128xf32>
    %18 = arith.addf %17, %10 : vector<16x128xf32>
    %19 = tpu.reciprocal %18 {approx = true} : vector<16x128xf32> -> vector<16x128xf32>
    %cst_4 = arith.constant 0.000000e+00 : f32
    %20 = vector.broadcast %cst_4 : f32 to vector<16x128xf32>
    %21 = arith.cmpf oge, %4, %20 : vector<16x128xf32>
    %22 = arith.mulf %10, %19 : vector<16x128xf32>
    %23 = arith.select %21, %19, %22 : vector<16x128xi1>, vector<16x128xf32>
    %cst_5 = arith.constant 2.000000e+00 : f32
    %24 = vector.broadcast %cst_5 : f32 to vector<16x128xf32>
    %25 = arith.mulf %24, %23 : vector<16x128xf32>
    %cst_6 = arith.constant 1.000000e+00 : f32
    %26 = vector.broadcast %cst_6 : f32 to vector<16x128xf32>
    %27 = arith.subf %26, %25 : vector<16x128xf32>
    %28 = arith.mulf %6, %27 : vector<16x128xf32>
    %29 = arith.addf %23, %28 : vector<16x128xf32>
    %cst_7 = arith.constant -5.000000e-01 : f32
    %30 = vector.broadcast %cst_7 : f32 to vector<16x128xf32>
    %31 = arith.mulf %6, %30 : vector<16x128xf32>
    %cst_8 = arith.constant 7.500000e-01 : f32
    %32 = vector.broadcast %cst_8 : f32 to vector<16x128xf32>
    %33 = arith.addf %32, %31 : vector<16x128xf32>
    %34 = math.sqrt %29 : vector<16x128xf32>
    %35 = arith.mulf %29, %34 : vector<16x128xf32>
    %36 = arith.mulf %16, %33 : vector<16x128xf32>
    %37 = arith.mulf %36, %35 : vector<16x128xf32>
    %38 = vector.shape_cast %37 : vector<16x128xf32> to vector<2x8x128xf32>
    %cst_9 = arith.constant dense<0.000000e+00> : vector<8x128xf32>
    %39 = vector.multi_reduction <add>, %38, %cst_9 [0] : vector<2x8x128xf32> to vector<8x128xf32>
    %40 = arith.addf %0, %39 : vector<8x128xf32>
    %c1_i32 = arith.constant 1 : i32
    %cst_10 = arith.constant dense<0.000000e+00> : vector<128xf32>
    %41 = vector.multi_reduction <add>, %40, %cst_10 [0] : vector<8x128xf32> to vector<128xf32>
    %42 = vector.shape_cast %41 : vector<128xf32> to vector<1x128xf32>
    %c0_11 = arith.constant 0 : index
    %c0_12 = arith.constant 0 : index
    %43 = vector.load %arg3[%c0_11, %c0_12] : memref<1x128xf32, #tpu.memory_space<vmem>>, vector<1x128xf32>
    tpu.vector_store %arg3[%c0_11, %c0_12], %42 {strides = array<i32>} : memref<1x128xf32, #tpu.memory_space<vmem>>, vector<1x128xf32>,
    return
  }
  func.func @transform_0(%arg0: i32) -> (i32, i32) {
    %c0_i32 = arith.constant 0 : i32
    %c0_i32_0 = arith.constant 0 : i32
    return %arg0, %c0_i32 : i32, i32
  }
  func.func @transform_1(%arg0: i32) -> (i32, i32) {
    %c0_i32 = arith.constant 0 : i32
    %c0_i32_0 = arith.constant 0 : i32
    return %arg0, %c0_i32 : i32, i32
  }
  func.func @transform_2(%arg0: i32) -> (i32, i32) {
    %c0_i32 = arith.constant 0 : i32
    %c0_i32_0 = arith.constant 0 : i32
    return %arg0, %c0_i32 : i32, i32
  }
}

</mosaic_0001>

<llo_original>
// kernel: tpu_custom_call.1
$region0: #{tpu_custom_call.1}
  #allocation0 [shape = 'u32[]', space=smem, size = 0x4, offset = 0x4, fixed_abs, tag = 'smem constant byte address 0x4 - core index']
  #allocation1 [shape = 'u32[144,128]{1,0:T(1,128)}', space=vmem, size = 0x12000, scoped, tag = 'internal scratch']
  %s0 = inlined_call_operand.hbm [shape: f32[16,128], index: 0, kind: input, shape index: {}]
  %s1 = inlined_call_operand.hbm [shape: f32[16,128], index: 1, kind: input, shape index: {}]
  %s2 = inlined_call_operand.hbm [shape: f32[1,128], index: 2, kind: output, shape index: {}]
  %s3 = sld [smem:[#allocation0]]
  $region26: #{tpu_custom_call.1} parent=0
    _
  %s5 = ssub.s32 1, %s3
  %s6 = scalar_select 0, %s5, %s3
  $region1: #{tpu_custom_call.1} parent=0
    #allocation2 [shape = 'u8[8192]{0}', space=vmem, size = 0x2000, scoped, tag = 'input window, operand 0, single buffered']
    #allocation3 [shape = 's32[1]{0}', space=sflag, size = 0x4, scoped, tag = 'scoped memory for tpu_custom_call.1']
    #allocation4 [shape = 's32[1]{0}', space=sflag, size = 0x4, scoped, tag = 'scoped memory for tpu_custom_call.1']
    #allocation5 [shape = 'u8[8192]{0}', space=vmem, size = 0x2000, scoped, tag = 'input window, operand 1, single buffered']
    #allocation6 [shape = 's32[1]{0}', space=sflag, size = 0x4, scoped, tag = 'scoped memory for tpu_custom_call.1']
    #allocation7 [shape = 'u8[512]{0}', space=vmem, size = 0x400, scoped, tag = 'output window, operand 0, single buffered']
    %7 = vsyncpa [#allocation3], 0
    %8 = vsyncpa [#allocation6], 0
    %9 = vsyncpa [#allocation4], 0
    // Predicated region
    $region2: #{tpu_custom_call.1} parent=1 // pred_check
      _
    $region3: #{tpu_custom_call.1} parent=1 // pred_check_branch
      %11 = sbr.rel (0) target = $region5
    $region4: #{tpu_custom_call.1} parent=1 // pred_region
      %s13 = ssub.s32 256, 256
      %14 = vsyncadd [#allocation3], %s13
      %s15 = sshll.u32 [#allocation2], 4
      %s16 = int_to_ptr.vmem [resolvable:$true] %s15
      %21 = dma.hbm_to_vmem [thread:$0]  %s0, 256, %s16, [#allocation3], 128, 128, 8
    $region5: #{tpu_custom_call.1} parent=1 // pred_fallthru
      _
    // Predicated region
    $region6: #{tpu_custom_call.1} parent=1 // pred_check
      _
    $region7: #{tpu_custom_call.1} parent=1 // pred_check_branch
      %23 = sbr.rel (0) target = $region9
    $region8: #{tpu_custom_call.1} parent=1 // pred_region
      %s25 = ssub.s32 256, 256
      %26 = vsyncadd [#allocation6], %s25
      %s27 = sshll.u32 [#allocation5], 4
      %s28 = int_to_ptr.vmem [resolvable:$true] %s27
      %33 = dma.hbm_to_vmem [thread:$0]  %s1, 256, %s28, [#allocation6], 128, 128, 8
    $region9: #{tpu_custom_call.1} parent=1 // pred_fallthru
      _
    // Predicated region
    $region10: #{tpu_custom_call.1} parent=1 // pred_check
      _
    $region11: #{tpu_custom_call.1} parent=1 // pred_check_branch
      %35 = sbr.rel (0) target = $region13
    $region12: #{tpu_custom_call.1} parent=1 // pred_region
      %36 = dma.done [#allocation3], 256
    $region13: #{tpu_custom_call.1} parent=1 // pred_fallthru
      _
    // Predicated region
    $region14: #{tpu_custom_call.1} parent=1 // pred_check
      _
    $region15: #{tpu_custom_call.1} parent=1 // pred_check_branch
      %38 = sbr.rel (0) target = $region17
    $region16: #{tpu_custom_call.1} parent=1 // pred_region
      %39 = dma.done [#allocation6], 256
    $region17: #{tpu_custom_call.1} parent=1 // pred_fallthru
      _
    %v40 = vld [vmem:[#allocation2] sm:$0xff]
    %v41 = vld [vmem:[#allocation2 + $0x8] sm:$0xff]
    %v42 = vld [vmem:[#allocation5] sm:$0xff]
    %v43 = vld [vmem:[#allocation5 + $0x8] sm:$0xff]
    %v44 = vand.u32 2147483647, %v40
    %v45 = vand.u32 2147483647, %v41
    %v46 = vsub.f32 0.0, %v44
    %v47 = vsub.f32 0.0, %v45
    %v48 = vmul.f32 %v46, 1.442695
    %v49 = vpow.pop %v48
    %v50 = vmul.f32 %v47, 1.442695
    %v51 = vpow.pop %v50
    %v52 = vmax.f32 %v40, 0.0
    %v53 = vmax.f32 %v41, 0.0
    %v54 = vmul.f32 %v40, %v42
    %v55 = vmul.f32 %v41, %v43
    %v56 = vsub.f32 %v52, %v54
    %v57 = vsub.f32 %v53, %v55
    %v58 = vadd.f32 %v49, 1.0
    %v59 = vlog2.pop %v58
    %v60 = vmul.f32 %v59, 0.6931472
    %v61 = vmul.f32 -0.5, %v49
    %v62 = vadd.f32 %v61, 1.0
    %v63 = vmul.f32 %v62, %v49
    %v64 = vand.u32 2147483647, %v49
    %vm65 = vcmp.lt.f32.partialorder %v64, 0.0004427343
    %v66 = vsel %vm65, %v63, %v60
    %v67 = vadd.f32 %v51, 1.0
    %v68 = vlog2.pop %v67
    %v69 = vmul.f32 %v68, 0.6931472
    %v70 = vmul.f32 -0.5, %v51
    %v71 = vadd.f32 %v70, 1.0
    %v72 = vmul.f32 %v71, %v51
    %v73 = vand.u32 2147483647, %v51
    %vm74 = vcmp.lt.f32.partialorder %v73, 0.0004427343
    %v75 = vsel %vm74, %v72, %v69
    %v76 = vadd.f32 %v56, %v66
    %v77 = vadd.f32 %v57, %v75
    %v78 = vadd.f32 %v49, 1.0
    %v79 = vadd.f32 %v51, 1.0
    %v80 = vrcp.pop %v78
    %v81 = vrcp.pop %v79
    %vm82 = vcmp.ge.f32.partialorder %v40, 0.0
    %vm83 = vcmp.ge.f32.partialorder %v41, 0.0
    %v84 = vmul.f32 %v49, %v80
    %v85 = vmul.f32 %v51, %v81
    %v86 = vsel %vm82, %v80, %v84
    %v87 = vsel %vm83, %v81, %v85
    %v88 = vmul.f32 %v86, 2.0
    %v89 = vmul.f32 %v87, 2.0
    %v90 = vsub.f32 1.0, %v88
    %v91 = vsub.f32 1.0, %v89
    %v92 = vmul.f32 %v42, %v90
    %v93 = vmul.f32 %v43, %v91
    %v94 = vadd.f32 %v86, %v92
    %v95 = vadd.f32 %v87, %v93
    %v96 = vmul.f32 %v42, -0.5
    %v97 = vmul.f32 %v43, -0.5
    %v98 = vadd.f32 %v96, 0.75
    %v99 = vadd.f32 %v97, 0.75
    %v100 = vrsqrt.pop %v94
    %v101 = vmul.f32 %v94, %v100
    %vm102 = vcmp.eq.f32.partialorder %v94, inf
    %v103 = vsel %vm102, %v94, %v101
    %vm104 = vcmp.eq.f32.partialorder %v94, 0.0
    %v105 = vand.u32 %v94, 2147483648
    %v106 = vsel %vm104, %v105, %v103
    %v107 = vrsqrt.pop %v95
    %v108 = vmul.f32 %v95, %v107
    %vm109 = vcmp.eq.f32.partialorder %v95, inf
    %v110 = vsel %vm109, %v95, %v108
    %vm111 = vcmp.eq.f32.partialorder %v95, 0.0
    %v112 = vand.u32 %v95, 2147483648
    %v113 = vsel %vm111, %v112, %v110
    %v114 = vmul.f32 %v94, %v106
    %v115 = vmul.f32 %v95, %v113
    %v116 = vmul.f32 %v76, %v98
    %v117 = vmul.f32 %v77, %v99
    %v118 = vmul.f32 %v116, %v114
    %v119 = vmul.f32 %v117, %v115
    %v120 = vadd.f32 %v118, %v119
    %v121 = vadd.f32 %v120, 0.0
    %v122 = vrot.slane %v121, 4
    %v123 = vadd.f32 %v121, %v122
    %v124 = vrot.slane %v123, 2
    %v125 = vadd.f32 %v123, %v124
    %v126 = vrot.slane %v125, 1
    %v127 = vadd.f32 %v125, %v126
    %128 = vst [vmem:[#allocation7] sm:$0x1] %v127
    // Predicated region
    $region18: #{tpu_custom_call.1} parent=1 // pred_check
      _
    $region19: #{tpu_custom_call.1} parent=1 // pred_check_branch
      %130 = sbr.rel (0) target = $region21
    $region20: #{tpu_custom_call.1} parent=1 // pred_region
      %s132 = ssub.s32 16, 16
      %133 = vsyncadd [#allocation4], %s132
      %s135 = sshll.u32 [#allocation7], 4
      %s136 = int_to_ptr.vmem [resolvable:$true] %s135
      %138 = dma.vmem_to_hbm [thread:$0]  %s136, 16, %s2, [#allocation4]
    $region21: #{tpu_custom_call.1} parent=1 // pred_fallthru
      _
    // Predicated region
    $region22: #{tpu_custom_call.1} parent=1 // pred_check
      _
    $region23: #{tpu_custom_call.1} parent=1 // pred_check_branch
      %140 = sbr.rel (0) target = $region25
    $region24: #{tpu_custom_call.1} parent=1 // pred_region
      %141 = dma.done [#allocation4], 16
    $region25: #{tpu_custom_call.1} parent=1 // pred_fallthru
      _
    %142 = vsyncpa [#allocation3], 1
    %143 = vsyncpa [#allocation6], 1
    %144 = vsyncpa [#allocation4], 1

</llo_original>
